<compile_context>
chip_gen: v5e
topology: v5e:2x2
jax: 0.10.0
libtpu: 0.0.40
codegen_flags: <defaults>
</compile_context>

<pallas_src>
import functools

import jax
import jax.numpy as jnp
from jax.experimental import pallas as pl
from jax.experimental.pallas import tpu as pltpu


def _round_up(n: int, m: int) -> int:
    return ((n + m - 1) // m) * m


# Per-step VMEM soft cap: leaves headroom under v7x's 64 MiB/TC while being a
# big enough window to keep v5e/v6e well past the ~85% HBM-roofline block size.
_VMEM_SOFT_CAP = 40 * 1024 * 1024
_VMEM_LIMIT_CAP = 48 * 1024 * 1024


def _fused_mlp_kernel(*refs, n_linear: int):
    """Fused forward for one batch tile: n_linear Linear layers, ReLU between.

    refs = (x_ref, w0_ref, b0_ref, ..., w{n-1}_ref, b{n-1}_ref, o_ref).
    Matmuls accumulate in f32 on the MXU; bias add + ReLU run in f32 on the
    VPU (v5e-friendly: no bf16 elementwise).
    """
    x_ref = refs[0]
    o_ref = refs[1 + 2 * n_linear]
    h = x_ref[...]
    for i in range(n_linear):
        w_ref = refs[1 + 2 * i]
        b_ref = refs[2 + 2 * i]
        h = jnp.dot(h, w_ref[...], preferred_element_type=jnp.float32)
        h = h + b_ref[...]  # b is (1, dout) -> broadcasts over the batch tile
        if i != n_linear - 1:
            h = jnp.maximum(h, 0.0)
    o_ref[...] = h.astype(o_ref.dtype)


def mlp_forward(x, params, *, tile_b: int = 4096, compute_dtype=None,
                out_dtype=None):
    """x: [B, Din]; params: tuple of (w [din, dout], b [dout]) pairs.

    compute_dtype: dtype for x / weights fed to the MXU (default: x.dtype).
    out_dtype:     dtype of the kernel's HBM output stream (default: x.dtype).
    """
    B, Din = x.shape
    n_linear = len(params)
    Dout = params[-1][0].shape[1]

    # Lane-dense final store: pad the last layer's output dim to a multiple of
    # 128 with zero columns (results unchanged; padding sliced off below).
    Dout_pad = _round_up(Dout, 128)

    cdt = x.dtype if compute_dtype is None else jnp.dtype(compute_dtype)
    odt = x.dtype if out_dtype is None else jnp.dtype(out_dtype)
    c_isz = jnp.dtype(cdt).itemsize
    o_isz = jnp.dtype(odt).itemsize

    # --- VMEM budget as a function of the batch tile -------------------------
    layer_out_dims = [w.shape[1] for w, _ in params[:-1]] + [Dout_pad]
    # Weights/biases: double-buffered by default (negligible at ~0.2 MiB here).
    w_bytes = 2 * sum((w.size + Dout_pad if li == n_linear - 1 else w.size + b.size)
                      for li, (w, b) in enumerate(params)) * c_isz

    def _budget(t):
        bts = 2 * t * Din * c_isz            # x block, double-buffered
        bts += 2 * t * Dout_pad * o_isz      # out block, double-buffered
        bts += 4 * t * sum(layer_out_dims)   # hidden activations: f32 VMEM scratch
        return bts + w_bytes

    # --- tile / grid selection -----------------------------------------------
    tile = min(tile_b, _round_up(B, 8))
    if B >= 16:
        # Guarantee >= 2 grid steps so both v7x TensorCores get a share
        # (harmless on single-TC v5e/v6e).
        tile = min(tile, _round_up(pl.cdiv(B, 2), 8))
    while tile > 8 and _budget(tile) > _VMEM_SOFT_CAP:
        tile = max(8, _round_up(tile // 2, 8))

    grid = (pl.cdiv(B, tile),)  # ragged last block: Pallas masks OOB reads/writes

    # --- inputs & specs -------------------------------------------------------
    flat_inputs = [x.astype(cdt)]
    in_specs = [pl.BlockSpec((tile, Din), lambda i: (i, 0))]
    for li, (w, b) in enumerate(params):
        din, dout = w.shape
        if li == n_linear - 1 and dout != Dout_pad:
            w = jnp.pad(w, ((0, 0), (0, Dout_pad - dout)))
            b = jnp.pad(b, (0, Dout_pad - dout))
            dout = Dout_pad
        flat_inputs += [w.astype(cdt), b.astype(jnp.float32).reshape(1, dout)]
        # Constant block index -> weights/biases stay VMEM-resident across the
        # batch grid (no re-DMA per tile).
        in_specs += [
            pl.BlockSpec((din, dout), lambda i: (0, 0)),
            pl.BlockSpec((1, dout), lambda i: (0, 0)),
        ]

    out_spec = pl.BlockSpec((tile, Dout_pad), lambda i: (i, 0))

    flops = 2 * B * sum(w.shape[0] * w.shape[1] for w, _ in params)
    bytes_accessed = (
        B * Din * c_isz
        + sum(a.size * a.dtype.itemsize for a in flat_inputs[1:])
        + B * Dout_pad * o_isz
    )

    vmem_limit = int(min(_VMEM_LIMIT_CAP, max(2 * _budget(tile), 16 * 1024 * 1024)))

    out = pl.pallas_call(
        functools.partial(_fused_mlp_kernel, n_linear=n_linear),
        out_shape=jax.ShapeDtypeStruct((B, Dout_pad), odt),
        grid=grid,
        in_specs=in_specs,
        out_specs=out_spec,
        compiler_params=pltpu.CompilerParams(
            dimension_semantics=("parallel",),
            vmem_limit_bytes=vmem_limit,
        ),
        cost_estimate=pl.CostEstimate(
            flops=flops, transcendentals=0, bytes_accessed=bytes_accessed
        ),
    )(*flat_inputs)

    # Column slice only (rows are already exactly B). Callers that can consume
    # the padded (B, 128) array directly may skip this slice to save one more
    # HBM pass.
    return out[:, :Dout]


def init_mlp_params(key, input_dim, output_dim, hidden_dim=128, num_layers=2):
    """Deterministic init mirroring nn.Linear shapes (stored as [in, out])."""
    dims = [input_dim] + [hidden_dim] * num_layers + [output_dim]
    params = []
    for i in range(len(dims) - 1):
        key, kw, kb = jax.random.split(key, 3)
        fan_in = dims[i]
        bound = 1.0 / jnp.sqrt(jnp.float32(fan_in))
        w = jax.random.uniform(
            kw, (dims[i], dims[i + 1]), jnp.float32, -bound, bound
        )
        b = jax.random.uniform(kb, (dims[i + 1],), jnp.float32, -bound, bound)
        params.append((w, b))
    return tuple(params)


def _ref_forward(x, params):
    h = x
    for i, (w, b) in enumerate(params):
        h = h @ w + b
        if i != len(params) - 1:
            h = jnp.maximum(h, 0.0)
    return h


if __name__ == "__main__":
    key = jax.random.PRNGKey(0)
    input_dim, hidden_dim, output_dim, num_layers = 32, 128, 10, 2

    kx1, kx2, kp = jax.random.split(key, 3)
    params = init_mlp_params(kp, input_dim, output_dim, hidden_dim, num_layers)

    mlp_forward_jit = jax.jit(mlp_forward)

    # Small batch (single grid step).
    x_small = jax.random.normal(kx1, (8, input_dim), jnp.float32)
    out_small = mlp_forward_jit(x_small, params)
    jax.block_until_ready(out_small)
    assert out_small.shape == (8, output_dim)
    assert jnp.allclose(out_small, _ref_forward(x_small, params),
                        atol=1e-5, rtol=1e-5)

    # Non-multiple batch: exercises the ragged last block + 2-step parallel grid.
    x_big = jax.random.normal(kx2, (300, input_dim), jnp.float32)
    out_big = mlp_forward_jit(x_big, params)
    jax.block_until_ready(out_big)
    assert out_big.shape == (300, output_dim)
    assert jnp.allclose(out_big, _ref_forward(x_big, params),
                        atol=1e-5, rtol=1e-5)

    print("KERNEL_OK")
</pallas_src>

<mosaic_0001>
module attributes {stable_mosaic.version = 11 : i64} {
  func.func @_fused_mlp_kernel(%arg0: i32, %arg1: memref<8x32xf32, #tpu.memory_space<vmem>>, %arg2: memref<32x128xf32, #tpu.memory_space<vmem>>, %arg3: memref<1x128xf32, #tpu.memory_space<vmem>>, %arg4: memref<128x128xf32, #tpu.memory_space<vmem>>, %arg5: memref<1x128xf32, #tpu.memory_space<vmem>>, %arg6: memref<128x128xf32, #tpu.memory_space<vmem>>, %arg7: memref<1x128xf32, #tpu.memory_space<vmem>>, %arg8: memref<8x128xf32, #tpu.memory_space<vmem>>) attributes {dimension_semantics = [#tpu.dimension_semantics<parallel>], iteration_bounds = array<i64: 1>, scalar_prefetch = 0 : i64, scratch_operands = 0 : i64, tpu.core_type = #tpu.core_type<tc>, window_params = [{transform_indices = @transform_0, window_bounds = array<i64: 8, 32>}, {pipeline_mode = #tpu.pipeline_mode<synchronous>, transform_indices = @transform_1, window_bounds = array<i64: 32, 128>}, {pipeline_mode = #tpu.pipeline_mode<synchronous>, transform_indices = @transform_2, window_bounds = array<i64: 1, 128>}, {pipeline_mode = #tpu.pipeline_mode<synchronous>, transform_indices = @transform_3, window_bounds = array<i64: 128, 128>}, {pipeline_mode = #tpu.pipeline_mode<synchronous>, transform_indices = @transform_4, window_bounds = array<i64: 1, 128>}, {pipeline_mode = #tpu.pipeline_mode<synchronous>, transform_indices = @transform_5, window_bounds = array<i64: 128, 128>}, {pipeline_mode = #tpu.pipeline_mode<synchronous>, transform_indices = @transform_6, window_bounds = array<i64: 1, 128>}, {transform_indices = @transform_7, window_bounds = array<i64: 8, 128>}]} {
    %c0 = arith.constant 0 : index
    %c0_0 = arith.constant 0 : index
    %0 = vector.load %arg1[%c0, %c0_0] : memref<8x32xf32, #tpu.memory_space<vmem>>, vector<8x32xf32>
    %c0_1 = arith.constant 0 : index
    %c0_2 = arith.constant 0 : index
    %1 = vector.load %arg2[%c0_1, %c0_2] : memref<32x128xf32, #tpu.memory_space<vmem>>, vector<32x128xf32>
    %cst = arith.constant dense<0.000000e+00> : vector<8x128xf32>
    %2 = tpu.matmul %0, %1, %cst {dimension_numbers = #tpu.dot_dimension_numbers<[1], [0], [0], [1], [0, 0, 1, 1], [], []>} : vector<8x32xf32>, vector<32x128xf32>, vector<8x128xf32> -> vector<8x128xf32>
    %c0_3 = arith.constant 0 : index
    %c0_4 = arith.constant 0 : index
    %3 = vector.load %arg3[%c0_3, %c0_4] : memref<1x128xf32, #tpu.memory_space<vmem>>, vector<1x128xf32>
    %4 = vector.broadcast %3 : vector<1x128xf32> to vector<8x128xf32>
    %5 = arith.addf %2, %4 : vector<8x128xf32>
    %cst_5 = arith.constant 0.000000e+00 : f32
    %6 = vector.broadcast %cst_5 : f32 to vector<8x128xf32>
    %7 = arith.maximumf %5, %6 : vector<8x128xf32>
    %c0_6 = arith.constant 0 : index
    %c0_7 = arith.constant 0 : index
    %8 = vector.load %arg4[%c0_6, %c0_7] : memref<128x128xf32, #tpu.memory_space<vmem>>, vector<128x128xf32>
    %cst_8 = arith.constant dense<0.000000e+00> : vector<8x128xf32>
    %9 = tpu.matmul %7, %8, %cst_8 {dimension_numbers = #tpu.dot_dimension_numbers<[1], [0], [0], [1], [0, 0, 1, 1], [], []>} : vector<8x128xf32>, vector<128x128xf32>, vector<8x128xf32> -> vector<8x128xf32>
    %c0_9 = arith.constant 0 : index
    %c0_10 = arith.constant 0 : index
    %10 = vector.load %arg5[%c0_9, %c0_10] : memref<1x128xf32, #tpu.memory_space<vmem>>, vector<1x128xf32>
    %11 = vector.broadcast %10 : vector<1x128xf32> to vector<8x128xf32>
    %12 = arith.addf %9, %11 : vector<8x128xf32>
    %cst_11 = arith.constant 0.000000e+00 : f32
    %13 = vector.broadcast %cst_11 : f32 to vector<8x128xf32>
    %14 = arith.maximumf %12, %13 : vector<8x128xf32>
    %c0_12 = arith.constant 0 : index
    %c0_13 = arith.constant 0 : index
    %15 = vector.load %arg6[%c0_12, %c0_13] : memref<128x128xf32, #tpu.memory_space<vmem>>, vector<128x128xf32>
    %cst_14 = arith.constant dense<0.000000e+00> : vector<8x128xf32>
    %16 = tpu.matmul %14, %15, %cst_14 {dimension_numbers = #tpu.dot_dimension_numbers<[1], [0], [0], [1], [0, 0, 1, 1], [], []>} : vector<8x128xf32>, vector<128x128xf32>, vector<8x128xf32> -> vector<8x128xf32>
    %c0_15 = arith.constant 0 : index
    %c0_16 = arith.constant 0 : index
    %17 = vector.load %arg7[%c0_15, %c0_16] : memref<1x128xf32, #tpu.memory_space<vmem>>, vector<1x128xf32>
    %18 = vector.broadcast %17 : vector<1x128xf32> to vector<8x128xf32>
    %19 = arith.addf %16, %18 : vector<8x128xf32>
    %c0_17 = arith.constant 0 : index
    %c0_18 = arith.constant 0 : index
    %20 = vector.load %arg8[%c0_17, %c0_18] : memref<8x128xf32, #tpu.memory_space<vmem>>, vector<8x128xf32>
    tpu.vector_store %arg8[%c0_17, %c0_18], %19 {strides = array<i32>} : memref<8x128xf32, #tpu.memory_space<vmem>>, vector<8x128xf32>,
    return
  }
  func.func @transform_0(%arg0: i32) -> (i32, i32) {
    %c0_i32 = arith.constant 0 : i32
    %c0_i32_0 = arith.constant 0 : i32
    return %arg0, %c0_i32 : i32, i32
  }
  func.func @transform_1(%arg0: i32) -> (i32, i32) {
    %c0_i32 = arith.constant 0 : i32
    %c0_i32_0 = arith.constant 0 : i32
    %c0_i32_1 = arith.constant 0 : i32
    return %c0_i32, %c0_i32_0 : i32, i32
  }
  func.func @transform_2(%arg0: i32) -> (i32, i32) {
    %c0_i32 = arith.constant 0 : i32
    %c0_i32_0 = arith.constant 0 : i32
    %c0_i32_1 = arith.constant 0 : i32
    return %c0_i32, %c0_i32_0 : i32, i32
  }
  func.func @transform_3(%arg0: i32) -> (i32, i32) {
    %c0_i32 = arith.constant 0 : i32
    %c0_i32_0 = arith.constant 0 : i32
    %c0_i32_1 = arith.constant 0 : i32
    return %c0_i32, %c0_i32_0 : i32, i32
  }
  func.func @transform_4(%arg0: i32) -> (i32, i32) {
    %c0_i32 = arith.constant 0 : i32
    %c0_i32_0 = arith.constant 0 : i32
    %c0_i32_1 = arith.constant 0 : i32
    return %c0_i32, %c0_i32_0 : i32, i32
  }
  func.func @transform_5(%arg0: i32) -> (i32, i32) {
    %c0_i32 = arith.constant 0 : i32
    %c0_i32_0 = arith.constant 0 : i32
    %c0_i32_1 = arith.constant 0 : i32
    return %c0_i32, %c0_i32_0 : i32, i32
  }
  func.func @transform_6(%arg0: i32) -> (i32, i32) {
    %c0_i32 = arith.constant 0 : i32
    %c0_i32_0 = arith.constant 0 : i32
    %c0_i32_1 = arith.constant 0 : i32
    return %c0_i32, %c0_i32_0 : i32, i32
  }
  func.func @transform_7(%arg0: i32) -> (i32, i32) {
    %c0_i32 = arith.constant 0 : i32
    %c0_i32_0 = arith.constant 0 : i32
    return %arg0, %c0_i32 : i32, i32
  }
}

</mosaic_0001>

<llo_original>
// kernel: mlp_forward.1
$region0: #{mlp_forward.1}
  #allocation0 [shape = 'u32[]', space=smem, size = 0x4, offset = 0x4, fixed_abs, tag = 'smem constant byte address 0x4 - core index']
  #allocation1 [shape = 'u32[72,128]{1,0:T(1,128)}', space=vmem, size = 0x9000, scoped, tag = 'internal scratch']
  %s0 = inlined_call_operand.vmem [shape: f32[8,32], index: 0, kind: input, shape index: {}]
  %s1 = inlined_call_operand.vmem [shape: f32[32,128], index: 1, kind: input, shape index: {}]
  %s2 = inlined_call_operand.vmem [shape: f32[1,128], index: 2, kind: input, shape index: {}]
  %s3 = inlined_call_operand.vmem [shape: f32[128,128], index: 3, kind: input, shape index: {}]
  %s4 = inlined_call_operand.vmem [shape: f32[1,128], index: 4, kind: input, shape index: {}]
  %s5 = inlined_call_operand.vmem [shape: f32[128,128], index: 5, kind: input, shape index: {}]
  %s6 = inlined_call_operand.vmem [shape: f32[1,128], index: 6, kind: input, shape index: {}]
  %s7 = inlined_call_operand.hbm [shape: f32[8,128], index: 7, kind: output, shape index: {}]
  %s8 = sld [smem:[#allocation0]]
  $region38: #{mlp_forward.1} parent=0
    _
  %s10 = ssub.s32 1, %s8
  %s11 = scalar_select 0, %s10, %s8
  $region1: #{mlp_forward.1} parent=0
    #allocation2 [shape = 'u8[4096]{0}', space=vmem, size = 0x1000, scoped, tag = 'output window, operand 0, single buffered']
    #allocation3 [shape = 's32[1]{0}', space=sflag, size = 0x4, scoped, tag = 'scoped memory for mlp_forward.1']
    %12 = vsyncpa [#allocation3], 0
    // Predicated region
    $region2: #{mlp_forward.1} parent=1 // pred_check
      _
    $region3: #{mlp_forward.1} parent=1 // pred_check_branch
      %14 = sbr.rel (0) target = $region5
    $region4: #{mlp_forward.1} parent=1 // pred_region
      _
    $region5: #{mlp_forward.1} parent=1 // pred_fallthru
      _
    // Predicated region
    $region6: #{mlp_forward.1} parent=1 // pred_check
      _
    $region7: #{mlp_forward.1} parent=1 // pred_check_branch
      %16 = sbr.rel (0) target = $region9
    $region8: #{mlp_forward.1} parent=1 // pred_region
      _
    $region9: #{mlp_forward.1} parent=1 // pred_fallthru
      _
    // Predicated region
    $region10: #{mlp_forward.1} parent=1 // pred_check
      _
    $region11: #{mlp_forward.1} parent=1 // pred_check_branch
      %18 = sbr.rel (0) target = $region13
    $region12: #{mlp_forward.1} parent=1 // pred_region
      _
    $region13: #{mlp_forward.1} parent=1 // pred_fallthru
      _
    // Predicated region
    $region14: #{mlp_forward.1} parent=1 // pred_check
      _
    $region15: #{mlp_forward.1} parent=1 // pred_check_branch
      %20 = sbr.rel (0) target = $region17
    $region16: #{mlp_forward.1} parent=1 // pred_region
      _
    $region17: #{mlp_forward.1} parent=1 // pred_fallthru
      _
    // Predicated region
    $region18: #{mlp_forward.1} parent=1 // pred_check
      _
    $region19: #{mlp_forward.1} parent=1 // pred_check_branch
      %22 = sbr.rel (0) target = $region21
    $region20: #{mlp_forward.1} parent=1 // pred_region
      _
    $region21: #{mlp_forward.1} parent=1 // pred_fallthru
      _
    // Predicated region
    $region22: #{mlp_forward.1} parent=1 // pred_check
      _
    $region23: #{mlp_forward.1} parent=1 // pred_check_branch
      %24 = sbr.rel (0) target = $region25
    $region24: #{mlp_forward.1} parent=1 // pred_region
      _
    $region25: #{mlp_forward.1} parent=1 // pred_fallthru
      _
    // Predicated region
    $region26: #{mlp_forward.1} parent=1 // pred_check
      _
    $region27: #{mlp_forward.1} parent=1 // pred_check_branch
      %26 = sbr.rel (0) target = $region29
    $region28: #{mlp_forward.1} parent=1 // pred_region
      _
    $region29: #{mlp_forward.1} parent=1 // pred_fallthru
      _
    %v27 = vld [vmem:[%s0] sm:$0xff]
    %v28 = vld [vmem:[%s1] sm:$0xff]
    %v29 = vld [vmem:[%s1 + $0x8] sm:$0xff]
    %v30 = vld [vmem:[%s1 + $0x10] sm:$0xff]
    %v31 = vld [vmem:[%s1 + $0x18] sm:$0xff]
    %v32 = vld [vmem:[%s2] sm:$0x1]
    %v34 = vperm.slane %v32, 0
    %vm36 = vcmask 261120
    %v38 = vsel %vm36, %v27, 0
    %40 = vmatpush.msra.mxu0 0.0
    %41 = vmatpush.msra.mxu0 0.0
    %42 = vmatpush.msra.mxu0 0.0
    %43 = vmatpush.msra.mxu0 0.0
    %44 = vmatpush.msra.mxu0 0.0
    %45 = vmatpush.msra.mxu0 0.0
    %46 = vmatpush.msra.mxu0 0.0
    %47 = vmatpush.msra.mxu0 0.0
    %48 = vmatpush.msra.mxu0 0.0
    %49 = vmatpush.msra.mxu0 0.0
    %50 = vmatpush.msra.mxu0 0.0
    %51 = vmatpush.msra.mxu0 0.0
    %52 = vmatpush.msra.mxu0 %v31
    %53 = vmatpush.msra.mxu0 %v30
    %54 = vmatpush.msra.mxu0 %v29
    %55 = vmatpush.msra.mxu0 %v28
    %56 = vmatmul.f32.gmra.mxu0 %v38
    %v57 = vpop.f32.mrf.mxu0
    %v58 = vadd.f32 %v34, %v57
    %59 = vdwg.mxu0
    %v60 = vmax.f32 %v58, 0.0
    %v61 = vld [vmem:[%s3] sm:$0xff]
    %v62 = vld [vmem:[%s3 + $0x8] sm:$0xff]
    %v63 = vld [vmem:[%s3 + $0x10] sm:$0xff]
    %v64 = vld [vmem:[%s3 + $0x18] sm:$0xff]
    %v65 = vld [vmem:[%s3 + $0x20] sm:$0xff]
    %v66 = vld [vmem:[%s3 + $0x28] sm:$0xff]
    %v67 = vld [vmem:[%s3 + $0x30] sm:$0xff]
    %v68 = vld [vmem:[%s3 + $0x38] sm:$0xff]
    %v69 = vld [vmem:[%s3 + $0x40] sm:$0xff]
    %v70 = vld [vmem:[%s3 + $0x48] sm:$0xff]
    %v71 = vld [vmem:[%s3 + $0x50] sm:$0xff]
    %v72 = vld [vmem:[%s3 + $0x58] sm:$0xff]
    %v73 = vld [vmem:[%s3 + $0x60] sm:$0xff]
    %v74 = vld [vmem:[%s3 + $0x68] sm:$0xff]
    %v75 = vld [vmem:[%s3 + $0x70] sm:$0xff]
    %v76 = vld [vmem:[%s3 + $0x78] sm:$0xff]
    %v77 = vld [vmem:[%s4] sm:$0x1]
    %v79 = vperm.slane %v77, 0
    %81 = vmatpush.msra.mxu0 %v76
    %82 = vmatpush.msra.mxu0 %v75
    %83 = vmatpush.msra.mxu0 %v74
    %84 = vmatpush.msra.mxu0 %v73
    %85 = vmatpush.msra.mxu0 %v72
    %86 = vmatpush.msra.mxu0 %v71
    %87 = vmatpush.msra.mxu0 %v70
    %88 = vmatpush.msra.mxu0 %v69
    %89 = vmatpush.msra.mxu0 %v68
    %90 = vmatpush.msra.mxu0 %v67
    %91 = vmatpush.msra.mxu0 %v66
    %92 = vmatpush.msra.mxu0 %v65
    %93 = vmatpush.msra.mxu0 %v64
    %94 = vmatpush.msra.mxu0 %v63
    %95 = vmatpush.msra.mxu0 %v62
    %96 = vmatpush.msra.mxu0 %v61
    %97 = vmatmul.f32.gmra.mxu0 %v60
    %v98 = vpop.f32.mrf.mxu0
    %v99 = vadd.f32 %v79, %v98
    %100 = vdwg.mxu0
    %v101 = vmax.f32 %v99, 0.0
    %v102 = vld [vmem:[%s5] sm:$0xff]
    %v103 = vld [vmem:[%s5 + $0x8] sm:$0xff]
    %v104 = vld [vmem:[%s5 + $0x10] sm:$0xff]
    %v105 = vld [vmem:[%s5 + $0x18] sm:$0xff]
    %v106 = vld [vmem:[%s5 + $0x20] sm:$0xff]
    %v107 = vld [vmem:[%s5 + $0x28] sm:$0xff]
    %v108 = vld [vmem:[%s5 + $0x30] sm:$0xff]
    %v109 = vld [vmem:[%s5 + $0x38] sm:$0xff]
    %v110 = vld [vmem:[%s5 + $0x40] sm:$0xff]
    %v111 = vld [vmem:[%s5 + $0x48] sm:$0xff]
    %v112 = vld [vmem:[%s5 + $0x50] sm:$0xff]
    %v113 = vld [vmem:[%s5 + $0x58] sm:$0xff]
    %v114 = vld [vmem:[%s5 + $0x60] sm:$0xff]
    %v115 = vld [vmem:[%s5 + $0x68] sm:$0xff]
    %v116 = vld [vmem:[%s5 + $0x70] sm:$0xff]
    %v117 = vld [vmem:[%s5 + $0x78] sm:$0xff]
    %v118 = vld [vmem:[%s6] sm:$0x1]
    %v120 = vperm.slane %v118, 0
    %122 = vmatpush.msra.mxu0 %v117
    %123 = vmatpush.msra.mxu0 %v116
    %124 = vmatpush.msra.mxu0 %v115
    %125 = vmatpush.msra.mxu0 %v114
    %126 = vmatpush.msra.mxu0 %v113
    %127 = vmatpush.msra.mxu0 %v112
    %128 = vmatpush.msra.mxu0 %v111
    %129 = vmatpush.msra.mxu0 %v110
    %130 = vmatpush.msra.mxu0 %v109
    %131 = vmatpush.msra.mxu0 %v108
    %132 = vmatpush.msra.mxu0 %v107
    %133 = vmatpush.msra.mxu0 %v106
    %134 = vmatpush.msra.mxu0 %v105
    %135 = vmatpush.msra.mxu0 %v104
    %136 = vmatpush.msra.mxu0 %v103
    %137 = vmatpush.msra.mxu0 %v102
    %138 = vmatmul.f32.gmra.mxu0 %v101
    %v139 = vpop.f32.mrf.mxu0
    %v140 = vadd.f32 %v120, %v139
    %141 = vdwg.mxu0
    %142 = vst [vmem:[#allocation2] sm:$0xff] %v140
    // Predicated region
    $region30: #{mlp_forward.1} parent=1 // pred_check
      _
    $region31: #{mlp_forward.1} parent=1 // pred_check_branch
      %144 = sbr.rel (0) target = $region33
    $region32: #{mlp_forward.1} parent=1 // pred_region
      %146 = vsyncadd [#allocation3], 0
      %s148 = sshll.u32 [#allocation2], 4
      %s149 = int_to_ptr.vmem [resolvable:$true] %s148
      %s150 = sshll.u32 %s7, 4
      %s151 = int_to_ptr.hbm [resolvable:$true] %s150
      %153 = dma.vmem_to_hbm [thread:$0]  %s149, 128, %s151, [#allocation3]
    $region33: #{mlp_forward.1} parent=1 // pred_fallthru
      _
    // Predicated region
    $region34: #{mlp_forward.1} parent=1 // pred_check
      _
    $region35: #{mlp_forward.1} parent=1 // pred_check_branch
      %155 = sbr.rel (0) target = $region37
    $region36: #{mlp_forward.1} parent=1 // pred_region
      %157 = dma.done [#allocation3], 128
    $region37: #{mlp_forward.1} parent=1 // pred_fallthru
      _
    %158 = vsyncpa [#allocation3], 1

</llo_original>
